<compile_context>
chip_gen: v5e
topology: v5e:2x2
jax: 0.10.0
libtpu: 0.0.40
codegen_flags: <defaults>
</compile_context>

<pallas_src>
import functools

import jax
import jax.numpy as jnp
from jax.experimental import pallas as pl
from jax.experimental.pallas import tpu as pltpu

_LANE = 128


def _round_up(v, m):
    return ((v + m - 1) // m) * m


def _sublane(dtype):
    """Native sublane packing for the dtype (rows per vreg tile)."""
    return {4: 8, 2: 16, 1: 32}.get(jnp.dtype(dtype).itemsize, 8)


def _num_tensorcores():
    try:
        kind = jax.devices()[0].device_kind.lower()
        if "v7" in kind:
            return 2
    except Exception:
        pass
    return 1


def _vmem_capacity_bytes():
    """Per-core VMEM capacity with a generation-aware fallback."""
    try:
        info = pltpu.get_tpu_info()
        cap = getattr(info, "vmem_capacity_bytes", None)
        if cap:
            return int(cap)
    except Exception:
        pass
    try:
        kind = jax.devices()[0].device_kind.lower()
        if "v7" in kind:
            return 64 * 1024 * 1024       # v7x: 64 MiB per TensorCore
    except Exception:
        pass
    return 128 * 1024 * 1024              # v5e / v6e physical VMEM


def _choose_tile_and_pad(dim, cap, unit):
    """Largest tile (multiple of `unit`, <= cap) dividing a padded dim."""
    cap = max(unit, (cap // unit) * unit)
    dim_pad = _round_up(dim, unit)
    if dim_pad <= cap:
        return dim_pad, dim_pad
    best = unit
    t = unit
    while t <= cap:
        if dim_pad % t == 0:
            best = t
        t += unit
    if best < cap // 2:
        # Poor divisibility -> pad a bit further to keep a large, dense tile.
        best = cap
        dim_pad = _round_up(dim_pad, best)
    return best, dim_pad


def _footprint(tm, tn, tk, xb, wb, ob):
    return (2 * tm * tk * xb              # double-buffered x tiles
            + 2 * tk * tn * wb            # double-buffered weight tiles
            + 2 * 1 * tn * max(4, wb)     # bias tiles
            + 2 * tm * tn * ob            # double-buffered out tiles
            + tm * tn * 4)                # f32 accumulator scratch


def _linear_kernel(x_ref, w_ref, b_ref, o_ref, acc_ref):
    # x_ref: (tm, tk)  w_ref: (tk, tn)  b_ref: (1, tn)  o_ref: (tm, tn)
    # acc_ref: (tm, tn) f32 scratch, resident across the K grid axis (axis 2).
    k = pl.program_id(2)

    # Plain MXU contraction -- the weight is already K-major, no per-step
    # transpose/relayout of the RHS tile.
    prod = jnp.dot(x_ref[...], w_ref[...], preferred_element_type=jnp.float32)

    @pl.when(k == 0)
    def _():
        acc_ref[...] = prod               # first step writes (no zero + add)

    @pl.when(k > 0)
    def _():
        acc_ref[...] += prod

    @pl.when(k == pl.num_programs(2) - 1)
    def _():
        o_ref[...] = (acc_ref[...] + b_ref[...].astype(jnp.float32)).astype(o_ref.dtype)


def prepare_linear_params(weight, bias, *, x_dtype=None):
    """One-time (outside jit) transform of nn.Linear params for the kernel.

    weight: (out_features, in_features) -> K-major, 128-padded (K_pad, N_pad)
    bias:   (out_features,)             -> (1, N_pad)
    Returns (w_t, b2d, plan) with plan = {'tile_n': int, 'tile_k': int}.
    """
    N, K = weight.shape
    del x_dtype  # tiles below fit all supported dtypes; kept for API symmetry
    budget = int(_vmem_capacity_bytes() * 0.75)
    big_vmem = budget > 64 * 1024 * 1024          # v5e / v6e (128 MiB)
    n_cap = 1536 if big_vmem else 1024
    k_cap = 2048 if big_vmem else 1024            # large tk amortizes acc RMW

    tile_n, N_pad = _choose_tile_and_pad(N, n_cap, _LANE)
    tile_k, K_pad = _choose_tile_and_pad(K, k_cap, _LANE)

    w_t = jnp.pad(weight, ((0, N_pad - N), (0, K_pad - K))).T     # (K_pad, N_pad)
    b2d = jnp.pad(bias, (0, N_pad - N)).reshape(1, N_pad)
    return w_t, b2d, dict(tile_n=int(tile_n), tile_k=int(tile_k))


def linear_embedding(x, w_t, b2d, *, out_features, tile_n, tile_k, tile_m=None):
    """y = x @ W^T + b with W pre-transposed/padded to (K_pad, N_pad)."""
    K_pad, N_pad = w_t.shape
    lead_shape = x.shape[:-1]
    K = x.shape[-1]
    x2d = x.reshape(-1, K)
    M = x2d.shape[0]

    xb = x2d.dtype.itemsize
    wb = w_t.dtype.itemsize
    ob = x2d.dtype.itemsize
    sub = _sublane(x2d.dtype)

    cap = _vmem_capacity_bytes()
    budget = int(cap * 0.75)
    m_cap = 1536 if budget > 64 * 1024 * 1024 else 1024
    if tile_m is None:
        tile_m, M_pad = _choose_tile_and_pad(M, m_cap, sub)
    else:
        tile_m = max(sub, _round_up(tile_m, sub))
        M_pad = _round_up(M, tile_m)

    # Safety net if tiles overflow VMEM: shrink K first, then N, then M
    # (shrinking M multiplies weight re-streaming -> last resort).
    while _footprint(tile_m, tile_n, tile_k, xb, wb, ob) > budget:
        if tile_k > _LANE and (tile_k // 2) % _LANE == 0 and K_pad % (tile_k // 2) == 0:
            tile_k //= 2
        elif tile_n > _LANE and (tile_n // 2) % _LANE == 0 and N_pad % (tile_n // 2) == 0:
            tile_n //= 2
        elif tile_m > sub and (tile_m // 2) % sub == 0 and M_pad % (tile_m // 2) == 0:
            tile_m //= 2
        else:
            break

    # Keep both v7x TensorCores fed: only force a split on multi-core chips,
    # and prefer splitting N (keeps MXU occupancy, balances W streaming).
    cores = _num_tensorcores()
    if cores > 1 and (M_pad // tile_m) * (N_pad // tile_n) < cores:
        if tile_n > _LANE and (tile_n // 2) % _LANE == 0:
            tile_n //= 2
        elif tile_m > sub and (tile_m // 2) % sub == 0:
            tile_m //= 2

    # Pad only the (small) activation per call; W/b were padded once at prepare.
    if (M_pad, K_pad) != (M, K):
        x2d = jnp.pad(x2d, ((0, M_pad - M), (0, K_pad - K)))

    grid = (M_pad // tile_m, N_pad // tile_n, K_pad // tile_k)

    fp = _footprint(tile_m, tile_n, tile_k, xb, wb, ob)
    vmem_limit = int(min(cap, max(int(fp * 1.25), 32 * 1024 * 1024)))

    cost = pl.CostEstimate(
        flops=2 * M * K * out_features,
        transcendentals=0,
        bytes_accessed=(grid[1] * M_pad * K_pad * xb      # x re-streamed per N tile
                        + grid[0] * K_pad * N_pad * wb    # W re-streamed per M tile
                        + M_pad * N_pad * ob
                        + N_pad * max(4, wb)),
    )

    out = pl.pallas_call(
        _linear_kernel,
        out_shape=jax.ShapeDtypeStruct((M_pad, N_pad), x2d.dtype),
        grid_spec=pltpu.PrefetchScalarGridSpec(
            num_scalar_prefetch=0,
            grid=grid,
            # pipeline_mode=pl.Buffered(3) on x/W is a sweep candidate when
            # VMEM headroom exists and DMA latency is exposed.
            in_specs=[
                pl.BlockSpec((tile_m, tile_k), lambda i, j, k: (i, k)),   # x (M, K)
                pl.BlockSpec((tile_k, tile_n), lambda i, j, k: (k, j)),   # W^T (K, N)
                pl.BlockSpec((1, tile_n), lambda i, j, k: (0, j)),        # bias (1, N)
            ],
            out_specs=pl.BlockSpec((tile_m, tile_n), lambda i, j, k: (i, j)),
            scratch_shapes=[pltpu.VMEM((tile_m, tile_n), jnp.float32)],
        ),
        compiler_params=pltpu.CompilerParams(
            dimension_semantics=("parallel", "parallel", "arbitrary"),
            vmem_limit_bytes=vmem_limit,
        ),
        cost_estimate=cost,
    )(x2d, w_t, b2d)

    out = out[:M, :out_features]
    return out.reshape(*lead_shape, out_features)


def init_linear_params(key, in_features, out_features, dtype=jnp.float32):
    """nn.Linear-style init: uniform(-1/sqrt(K), 1/sqrt(K))."""
    k_w, k_b = jax.random.split(key)
    bound = 1.0 / (in_features ** 0.5)
    weight = jax.random.uniform(
        k_w, (out_features, in_features), dtype=dtype, minval=-bound, maxval=bound
    )
    bias = jax.random.uniform(
        k_b, (out_features,), dtype=dtype, minval=-bound, maxval=bound
    )
    return weight, bias


if __name__ == "__main__":
    key = jax.random.PRNGKey(0)
    k_x, k_p = jax.random.split(key)

    batch, seq, in_features, out_features = 2, 8, 32, 64
    x = jax.random.normal(k_x, (batch, seq, in_features), dtype=jnp.float32)
    weight, bias = init_linear_params(k_p, in_features, out_features)

    # One-time param prep (outside jit): pad + transpose W to K-major.
    w_t, b2d, plan = prepare_linear_params(weight, bias, x_dtype=x.dtype)

    fn = jax.jit(functools.partial(linear_embedding, out_features=out_features, **plan))
    y = jax.block_until_ready(fn(x, w_t, b2d))

    # correctness check vs. plain JAX reference
    y_ref = x @ weight.T + bias
    assert y.shape == (batch, seq, out_features)
    assert jnp.allclose(y, y_ref, atol=1e-4, rtol=1e-4), float(
        jnp.max(jnp.abs(y - y_ref))
    )

    print("KERNEL_OK")
</pallas_src>

<mosaic_0001>
module attributes {stable_mosaic.version = 11 : i64} {
  func.func @_linear_kernel(%arg0: i32, %arg1: i32, %arg2: i32, %arg3: memref<16x128xf32, #tpu.memory_space<vmem>>, %arg4: memref<128x128xf32, #tpu.memory_space<vmem>>, %arg5: memref<1x128xf32, #tpu.memory_space<vmem>>, %arg6: memref<16x128xf32, #tpu.memory_space<vmem>>, %arg7: memref<16x128xf32, #tpu.memory_space<vmem>>) attributes {dimension_semantics = [#tpu.dimension_semantics<parallel>, #tpu.dimension_semantics<parallel>, #tpu.dimension_semantics<arbitrary>], iteration_bounds = array<i64: 1, 1, 1>, scalar_prefetch = 0 : i64, scratch_operands = 1 : i64, tpu.core_type = #tpu.core_type<tc>, window_params = [{transform_indices = @transform_0, window_bounds = array<i64: 16, 128>}, {transform_indices = @transform_1, window_bounds = array<i64: 128, 128>}, {transform_indices = @transform_2, window_bounds = array<i64: 1, 128>}, {transform_indices = @transform_3, window_bounds = array<i64: 16, 128>}]} {
    %c0 = arith.constant 0 : index
    %c0_0 = arith.constant 0 : index
    %0 = vector.load %arg3[%c0, %c0_0] : memref<16x128xf32, #tpu.memory_space<vmem>>, vector<16x128xf32>
    %c0_1 = arith.constant 0 : index
    %c0_2 = arith.constant 0 : index
    %1 = vector.load %arg4[%c0_1, %c0_2] : memref<128x128xf32, #tpu.memory_space<vmem>>, vector<128x128xf32>
    %cst = arith.constant dense<0.000000e+00> : vector<16x128xf32>
    %2 = tpu.matmul %0, %1, %cst {dimension_numbers = #tpu.dot_dimension_numbers<[1], [0], [0], [1], [0, 0, 1, 1], [], []>} : vector<16x128xf32>, vector<128x128xf32>, vector<16x128xf32> -> vector<16x128xf32>
    %c0_i32 = arith.constant 0 : i32
    %3 = arith.cmpi eq, %arg2, %c0_i32 : i32
    %4 = arith.extui %3 : i1 to i32
    %c0_i32_3 = arith.constant 0 : i32
    %5 = arith.cmpi ne, %4, %c0_i32_3 : i32
    scf.if %5 {
      %c0_8 = arith.constant 0 : index
      %c0_9 = arith.constant 0 : index
      %12 = vector.load %arg7[%c0_8, %c0_9] : memref<16x128xf32, #tpu.memory_space<vmem>>, vector<16x128xf32>
      tpu.vector_store %arg7[%c0_8, %c0_9], %2 {strides = array<i32>} : memref<16x128xf32, #tpu.memory_space<vmem>>, vector<16x128xf32>,
    } else {
    }
    %c0_i32_4 = arith.constant 0 : i32
    %6 = arith.cmpi sgt, %arg2, %c0_i32_4 : i32
    %7 = arith.extui %6 : i1 to i32
    %c0_i32_5 = arith.constant 0 : i32
    %8 = arith.cmpi ne, %7, %c0_i32_5 : i32
    scf.if %8 {
      %c0_8 = arith.constant 0 : index
      %c0_9 = arith.constant 0 : index
      %12 = vector.load %arg7[%c0_8, %c0_9] : memref<16x128xf32, #tpu.memory_space<vmem>>, vector<16x128xf32>
      %13 = arith.addf %12, %2 : vector<16x128xf32>
      %c0_10 = arith.constant 0 : index
      %c0_11 = arith.constant 0 : index
      %14 = vector.load %arg7[%c0_10, %c0_11] : memref<16x128xf32, #tpu.memory_space<vmem>>, vector<16x128xf32>
      tpu.vector_store %arg7[%c0_10, %c0_11], %13 {strides = array<i32>} : memref<16x128xf32, #tpu.memory_space<vmem>>, vector<16x128xf32>,
    } else {
    }
    %c0_i32_6 = arith.constant 0 : i32
    %9 = arith.cmpi eq, %arg2, %c0_i32_6 : i32
    %10 = arith.extui %9 : i1 to i32
    %c0_i32_7 = arith.constant 0 : i32
    %11 = arith.cmpi ne, %10, %c0_i32_7 : i32
    scf.if %11 {
      %c0_8 = arith.constant 0 : index
      %c0_9 = arith.constant 0 : index
      %12 = vector.load %arg7[%c0_8, %c0_9] : memref<16x128xf32, #tpu.memory_space<vmem>>, vector<16x128xf32>
      %c0_10 = arith.constant 0 : index
      %c0_11 = arith.constant 0 : index
      %13 = vector.load %arg5[%c0_10, %c0_11] : memref<1x128xf32, #tpu.memory_space<vmem>>, vector<1x128xf32>
      %14 = vector.broadcast %13 : vector<1x128xf32> to vector<16x128xf32>
      %15 = arith.addf %12, %14 : vector<16x128xf32>
      %c0_12 = arith.constant 0 : index
      %c0_13 = arith.constant 0 : index
      %16 = vector.load %arg6[%c0_12, %c0_13] : memref<16x128xf32, #tpu.memory_space<vmem>>, vector<16x128xf32>
      tpu.vector_store %arg6[%c0_12, %c0_13], %15 {strides = array<i32>} : memref<16x128xf32, #tpu.memory_space<vmem>>, vector<16x128xf32>,
    } else {
    }
    return
  }
  func.func @transform_0(%arg0: i32, %arg1: i32, %arg2: i32) -> (i32, i32) {
    %c0_i32 = arith.constant 0 : i32
    return %arg0, %arg2 : i32, i32
  }
  func.func @transform_1(%arg0: i32, %arg1: i32, %arg2: i32) -> (i32, i32) {
    %c0_i32 = arith.constant 0 : i32
    return %arg2, %arg1 : i32, i32
  }
  func.func @transform_2(%arg0: i32, %arg1: i32, %arg2: i32) -> (i32, i32) {
    %c0_i32 = arith.constant 0 : i32
    %c0_i32_0 = arith.constant 0 : i32
    return %c0_i32, %arg1 : i32, i32
  }
  func.func @transform_3(%arg0: i32, %arg1: i32, %arg2: i32) -> (i32, i32) {
    %c0_i32 = arith.constant 0 : i32
    return %arg0, %arg1 : i32, i32
  }
}

</mosaic_0001>

<llo_original>
// kernel: linear_embedding.1
$region0: #{linear_embedding.1}
  #allocation0 [shape = 'u32[]', space=smem, size = 0x4, offset = 0x4, fixed_abs, tag = 'smem constant byte address 0x4 - core index']
  #allocation1 [shape = 'u32[72,128]{1,0:T(1,128)}', space=vmem, size = 0x9000, scoped, tag = 'internal scratch']
  #allocation2 [shape = 'f32[16,128]{1,0:T(8,128)}', space=vmem, size = 0x2000, scoped, tag = 'scratch operand']
  %s0 = inlined_call_operand.vmem [shape: f32[16,128], index: 0, kind: input, shape index: {}]
  %s1 = inlined_call_operand.hbm [shape: f32[128,128], index: 1, kind: input, shape index: {}]
  %s2 = inlined_call_operand.vmem [shape: f32[1,128], index: 2, kind: input, shape index: {}]
  %s3 = inlined_call_operand.vmem [shape: f32[16,128], index: 3, kind: output, shape index: {}]
  %s4 = sld [smem:[#allocation0]]
  $region38: #{linear_embedding.1} parent=0
    _
  %s6 = ssub.s32 1, %s4
  %s7 = scalar_select 0, %s6, %s4
  $region1: #{linear_embedding.1} parent=0
    #allocation3 [shape = 'u8[65536]{0}', space=vmem, size = 0x10000, scoped, tag = 'input window, operand 1, single buffered']
    #allocation4 [shape = 's32[1]{0}', space=sflag, size = 0x4, scoped, tag = 'scoped memory for linear_embedding.1']
    %8 = vsyncpa [#allocation4], 0
    // Predicated region
    $region2: #{linear_embedding.1} parent=1 // pred_check
      _
    $region3: #{linear_embedding.1} parent=1 // pred_check_branch
      %10 = sbr.rel (0) target = $region5
    $region4: #{linear_embedding.1} parent=1 // pred_region
      _
    $region5: #{linear_embedding.1} parent=1 // pred_fallthru
      _
    // Predicated region
    $region6: #{linear_embedding.1} parent=1 // pred_check
      _
    $region7: #{linear_embedding.1} parent=1 // pred_check_branch
      %12 = sbr.rel (0) target = $region9
    $region8: #{linear_embedding.1} parent=1 // pred_region
      %14 = vsyncadd [#allocation4], 0
      %s15 = sshll.u32 %s1, 4
      %s16 = int_to_ptr.hbm [resolvable:$true] %s15
      %s17 = sshll.u32 [#allocation3], 4
      %s18 = int_to_ptr.vmem [resolvable:$true] %s17
      %23 = dma.hbm_to_vmem [thread:$0]  %s16, 2048, %s18, [#allocation4], 128, 128, 8
    $region9: #{linear_embedding.1} parent=1 // pred_fallthru
      _
    // Predicated region
    $region10: #{linear_embedding.1} parent=1 // pred_check
      _
    $region11: #{linear_embedding.1} parent=1 // pred_check_branch
      %25 = sbr.rel (0) target = $region13
    $region12: #{linear_embedding.1} parent=1 // pred_region
      _
    $region13: #{linear_embedding.1} parent=1 // pred_fallthru
      _
    // Predicated region
    $region14: #{linear_embedding.1} parent=1 // pred_check
      _
    $region15: #{linear_embedding.1} parent=1 // pred_check_branch
      %27 = sbr.rel (0) target = $region17
    $region16: #{linear_embedding.1} parent=1 // pred_region
      %29 = dma.done [#allocation4], 2048
    $region17: #{linear_embedding.1} parent=1 // pred_fallthru
      _
    %v30 = vld [vmem:[%s0] sm:$0xff]
    %v31 = vld [vmem:[%s0 + $0x8] sm:$0xff]
    %v32 = vld [vmem:[#allocation3] sm:$0xff]
    %v33 = vld [vmem:[#allocation3 + $0x8] sm:$0xff]
    %v34 = vld [vmem:[#allocation3 + $0x10] sm:$0xff]
    %v35 = vld [vmem:[#allocation3 + $0x18] sm:$0xff]
    %v36 = vld [vmem:[#allocation3 + $0x20] sm:$0xff]
    %v37 = vld [vmem:[#allocation3 + $0x28] sm:$0xff]
    %v38 = vld [vmem:[#allocation3 + $0x30] sm:$0xff]
    %v39 = vld [vmem:[#allocation3 + $0x38] sm:$0xff]
    %v40 = vld [vmem:[#allocation3 + $0x40] sm:$0xff]
    %v41 = vld [vmem:[#allocation3 + $0x48] sm:$0xff]
    %v42 = vld [vmem:[#allocation3 + $0x50] sm:$0xff]
    %v43 = vld [vmem:[#allocation3 + $0x58] sm:$0xff]
    %v44 = vld [vmem:[#allocation3 + $0x60] sm:$0xff]
    %v45 = vld [vmem:[#allocation3 + $0x68] sm:$0xff]
    %v46 = vld [vmem:[#allocation3 + $0x70] sm:$0xff]
    %v47 = vld [vmem:[#allocation3 + $0x78] sm:$0xff]
    %48 = vmatpush.msra.mxu0 %v47
    %49 = vmatpush.msra.mxu0 %v46
    %50 = vmatpush.msra.mxu0 %v45
    %51 = vmatpush.msra.mxu0 %v44
    %52 = vmatpush.msra.mxu0 %v43
    %53 = vmatpush.msra.mxu0 %v42
    %54 = vmatpush.msra.mxu0 %v41
    %55 = vmatpush.msra.mxu0 %v40
    %56 = vmatpush.msra.mxu0 %v39
    %57 = vmatpush.msra.mxu0 %v38
    %58 = vmatpush.msra.mxu0 %v37
    %59 = vmatpush.msra.mxu0 %v36
    %60 = vmatpush.msra.mxu0 %v35
    %61 = vmatpush.msra.mxu0 %v34
    %62 = vmatpush.msra.mxu0 %v33
    %63 = vmatpush.msra.mxu0 %v32
    %64 = vmatmul.f32.gmra.mxu0 %v30
    %v65 = vpop.f32.mrf.mxu0
    %v66 = vadd.f32 0.0, %v65
    %67 = vmatmul.f32.gmra.mxu0 %v31
    %v68 = vpop.f32.mrf.mxu0
    %v69 = vadd.f32 0.0, %v68
    %70 = vdwg.mxu0
    %p71 = scmp.eq.s32.totalorder 0, 0
    // Predicated region
    $region18: #{linear_embedding.1} parent=1 // pred_check
      %p72 = pneg %p71
    $region19: #{linear_embedding.1} parent=1 // pred_check_branch
      %74 = sbr.rel (%p72) target = $region21
    $region20: #{linear_embedding.1} parent=1 // pred_region
      %75 = vst [vmem:[#allocation2] sm:$0xff] %v66
      %76 = vst [vmem:[#allocation2 + $0x8] sm:$0xff] %v69
    $region21: #{linear_embedding.1} parent=1 // pred_fallthru
      _
    %p77 = scmp.gt.s32.totalorder 0, 0
    // Predicated region
    $region22: #{linear_embedding.1} parent=1 // pred_check
      %p78 = pneg %p77
    $region23: #{linear_embedding.1} parent=1 // pred_check_branch
      %80 = sbr.rel (%p78) target = $region25
    $region24: #{linear_embedding.1} parent=1 // pred_region
      %v81 = vld [vmem:[#allocation2] sm:$0xff]
      %v82 = vld [vmem:[#allocation2 + $0x8] sm:$0xff]
      %v83 = vadd.f32 %v81, %v66
      %v84 = vadd.f32 %v82, %v69
      %85 = vst [vmem:[#allocation2] sm:$0xff] %v83
      %86 = vst [vmem:[#allocation2 + $0x8] sm:$0xff] %v84
    $region25: #{linear_embedding.1} parent=1 // pred_fallthru
      _
    // Predicated region
    $region26: #{linear_embedding.1} parent=1 // pred_check
      %p87 = pneg %p71
    $region27: #{linear_embedding.1} parent=1 // pred_check_branch
      %89 = sbr.rel (%p87) target = $region29
    $region28: #{linear_embedding.1} parent=1 // pred_region
      %v90 = vld [vmem:[#allocation2] sm:$0xff]
      %v91 = vld [vmem:[#allocation2 + $0x8] sm:$0xff]
      %v92 = vld [vmem:[%s2] sm:$0x1]
      %v94 = vperm.slane %v92, 0
      %v96 = vadd.f32 %v90, %v94
      %v97 = vadd.f32 %v91, %v94
      %98 = vst [vmem:[%s3] sm:$0xff] %v96
      %99 = vst [vmem:[%s3 + $0x8] sm:$0xff] %v97
    $region29: #{linear_embedding.1} parent=1 // pred_fallthru
      _
    // Predicated region
    $region30: #{linear_embedding.1} parent=1 // pred_check
      _
    $region31: #{linear_embedding.1} parent=1 // pred_check_branch
      %101 = sbr.rel (0) target = $region33
    $region32: #{linear_embedding.1} parent=1 // pred_region
      _
    $region33: #{linear_embedding.1} parent=1 // pred_fallthru
      _
    // Predicated region
    $region34: #{linear_embedding.1} parent=1 // pred_check
      _
    $region35: #{linear_embedding.1} parent=1 // pred_check_branch
      %103 = sbr.rel (0) target = $region37
    $region36: #{linear_embedding.1} parent=1 // pred_region
      _
    $region37: #{linear_embedding.1} parent=1 // pred_fallthru
      _
    %104 = vsyncpa [#allocation4], 1

</llo_original>
